<compile_context>
chip_gen: v7x
topology: tpu7x:2x2x1
jax: 0.10.0
libtpu: 0.0.40
codegen_flags: <defaults>
</compile_context>

<pallas_src>
import functools

import jax
import jax.numpy as jnp
import numpy as np
from jax.experimental import pallas as pl
from jax.experimental.pallas import tpu as pltpu


def _lattice_layer_kernel(n_ref,        # scalar prefetch, SMEM: [B] int32
                          x_ref,        # (1, TL, D)       inputs tile (bf16)
                          v_ref,        # (1, NF, TL, D)   values tile (bf16)
                          woc_ref,      # (D, D)  linear_out context half (bf16)
                          woq_ref,      # (D, D)  linear_out query half   (bf16)
                          w1_ref,       # (D, F)  feed-forward w_1 (bf16, [in,out])
                          b1_ref,       # (1, F)  f32
                          w2_ref,       # (F, D)  feed-forward w_2 (bf16, [in,out])
                          b2_ref,       # (1, D)  f32
                          ga_ref,       # (1, D)  onmt LayerNorm a_2 (f32)
                          gb_ref,       # (1, D)  onmt LayerNorm b_2 (f32)
                          o_ref,        # (1, TL, D)
                          *, num_fac, d_model):
    b = pl.program_id(0)
    n_b = n_ref[b]
    D = d_model

    x_bf = x_ref[0]                          # (TL, D) bf16 — MXU operand as-is
    x = x_bf.astype(jnp.float32)             # (TL, D) f32 — VPU math
    TL = x.shape[0]
    NEG = jnp.float32(-1e30)

    # ---- lattice dot-attention over NF factors, two-pass softmax -----------
    # Factor slices index the leading NF axis of v_ref (free), no lane slicing.
    # Pass 1: masked scores + running max (scores are tiny (TL,1) slabs).
    scores = []
    m = jnp.full((TL, 1), NEG, jnp.float32)
    for t in range(num_fac):                 # num_fac is a static Python int
        vt = v_ref[0, t].astype(jnp.float32)             # (TL, D)
        s = jnp.sum(x * vt, axis=-1, keepdims=True)      # (TL, 1)
        s = jnp.where(t < n_b, s, NEG)                   # scalar factor mask
        scores.append(s)
        m = jnp.maximum(m, s)
    # Pass 2: exponentiate + accumulate context (no per-factor rescale).
    l = jnp.zeros((TL, 1), jnp.float32)
    ctx = jnp.zeros((TL, D), jnp.float32)
    for t in range(num_fac):
        p = jnp.exp(scores[t] - m)                       # (TL, 1)
        l = l + p
        ctx = ctx + p * v_ref[0, t].astype(jnp.float32)  # (TL, D)
    ctx = ctx * pl.reciprocal(l, approx=True)            # EUP, VPU slot freed

    # ---- linear_out([c ; q]) + tanh: two accumulating K=D bf16 matmuls -----
    attn_h = jnp.tanh(
        jnp.dot(ctx.astype(jnp.bfloat16), woc_ref[...],
                preferred_element_type=jnp.float32)
        + jnp.dot(x_bf, woq_ref[...], preferred_element_type=jnp.float32))
    out = attn_h + x                                     # dropout == identity

    # ---- PositionwiseFeedForward with onmt LayerNorm ------------------------
    mean = jnp.mean(out, axis=-1, keepdims=True)
    cen = out - mean
    std = jnp.sqrt(jnp.sum(cen * cen, axis=-1, keepdims=True) / (D - 1))
    ln = ga_ref[0] * cen * pl.reciprocal(std + 1e-6, approx=True) + gb_ref[0]

    inter = jnp.maximum(
        jnp.dot(ln.astype(jnp.bfloat16), w1_ref[...],
                preferred_element_type=jnp.float32) + b1_ref[0], 0.0)
    y = (jnp.dot(inter.astype(jnp.bfloat16), w2_ref[...],
                 preferred_element_type=jnp.float32)
         + b2_ref[0] + out)

    o_ref[0] = y.astype(o_ref.dtype)


def _vmem_capacity_bytes():
    """Per-core VMEM capacity; conservative (v7x, 64 MiB) when unqueryable."""
    try:
        info = pltpu.get_tpu_info()
        cap = getattr(info, "vmem_capacity_bytes", None)
        if cap:
            return int(cap)
    except Exception:
        pass
    return 64 * 1024 * 1024


def lattice_encoder_layer(inputs, values, n, params, *, tl_max=1024,
                          out_dtype=jnp.float32):
    """inputs [B,L,D] f32, values [B,L,NF*D] f32, n [B] int32 (valid factors)."""
    B, L, D = inputs.shape
    NF = values.shape[-1] // D
    F = params["w1"].shape[-1]

    # bf16 HBM storage for the bandwidth-dominating operands; values re-laid
    # out to (B, NF, L, D) so the kernel indexes factors on a leading axis
    # (the transpose fuses with the f32->bf16 cast pass in XLA).
    inputs_b = inputs.astype(jnp.bfloat16)
    values_b = values.reshape(B, L, NF, D).transpose(0, 2, 1, 3).astype(jnp.bfloat16)

    # bf16 weights feed the MXU natively and halve weight HBM/VMEM footprint.
    woc = params["wo_c"].astype(jnp.bfloat16)
    woq = params["wo_q"].astype(jnp.bfloat16)
    w1 = params["w1"].astype(jnp.bfloat16)
    w2 = params["w2"].astype(jnp.bfloat16)
    b1 = params["b1"].astype(jnp.float32)
    b2 = params["b2"].astype(jnp.float32)
    ga = params["ln_a"].astype(jnp.float32)
    gb = params["ln_b"].astype(jnp.float32)

    # ---- per-generation VMEM sizing -----------------------------------------
    vmem_cap = _vmem_capacity_bytes()                       # 64 MiB v7x, 128 MiB v5e/v6e
    vmem_limit = min(int(vmem_cap * 0.75), vmem_cap - (8 << 20))
    out_bytes = jnp.dtype(out_dtype).itemsize
    # weights (pipeline double-buffers them) + f32 biases / LN params
    weight_bytes = 2 * ((2 * D * D + 2 * D * F) * 2 + (F + 3 * D) * 4)
    # per-row bytes: double-buffered bf16 in-tiles + out tile ...
    io_row = 2 * ((NF * D + D) * 2 + D * out_bytes)
    # ... plus in-kernel f32 temporaries (x/ctx/attn_h/out/ln/y slabs, inter,
    # bf16 matmul casts) — previously un-counted.
    tmp_row = (8 * D + 2 * F) * 4
    budget = vmem_limit - weight_bytes - (2 << 20)          # 2 MiB slack
    tl_cap = max(8, budget // (io_row + tmp_row))
    if tl_cap >= 256:
        tl_cap = (tl_cap // 256) * 256                      # MXU-friendly (256x256)
    else:
        tl_cap = (tl_cap // 8) * 8
    TL = L if L <= min(tl_max, tl_cap) else min(tl_max, tl_cap)
    num_lt = pl.cdiv(L, TL)

    kernel = functools.partial(_lattice_layer_kernel, num_fac=NF, d_model=D)

    grid_spec = pltpu.PrefetchScalarGridSpec(
        num_scalar_prefetch=1,                              # `n` lands in SMEM
        grid=(B, num_lt),
        in_specs=[
            pl.BlockSpec((1, TL, D), lambda b, lt, n_ref: (b, lt, 0)),        # inputs
            pl.BlockSpec((1, NF, TL, D), lambda b, lt, n_ref: (b, 0, lt, 0)), # values
            pl.BlockSpec((D, D), lambda b, lt, n_ref: (0, 0)),                # wo_c
            pl.BlockSpec((D, D), lambda b, lt, n_ref: (0, 0)),                # wo_q
            pl.BlockSpec((D, F), lambda b, lt, n_ref: (0, 0)),                # w1
            pl.BlockSpec((1, F), lambda b, lt, n_ref: (0, 0)),                # b1
            pl.BlockSpec((F, D), lambda b, lt, n_ref: (0, 0)),                # w2
            pl.BlockSpec((1, D), lambda b, lt, n_ref: (0, 0)),                # b2
            pl.BlockSpec((1, D), lambda b, lt, n_ref: (0, 0)),                # ln gain
            pl.BlockSpec((1, D), lambda b, lt, n_ref: (0, 0)),                # ln bias
        ],
        out_specs=pl.BlockSpec((1, TL, D), lambda b, lt, n_ref: (b, lt, 0)),
    )

    return pl.pallas_call(
        kernel,
        out_shape=jax.ShapeDtypeStruct((B, L, D), out_dtype),
        grid_spec=grid_spec,
        compiler_params=pltpu.CompilerParams(
            dimension_semantics=("parallel", "parallel"),
            vmem_limit_bytes=vmem_limit),
    )(n, inputs_b, values_b, woc, woq, w1, b1, w2, b2, ga, gb)


def reference(inputs, values, n, params):
    """Pure-JAX f32 reference of the same forward pass."""
    B, L, D = inputs.shape
    NF = values.shape[-1] // D
    vr = values.reshape(B, L, NF, D)
    s = jnp.einsum("bld,blfd->blf", inputs, vr)
    mask = jnp.arange(NF)[None, None, :] < n[:, None, None]
    s = jnp.where(mask, s, -1e30)
    a = jax.nn.softmax(s, axis=-1)
    c = jnp.einsum("blf,blfd->bld", a, vr)
    attn_h = jnp.tanh(c @ params["wo_c"] + inputs @ params["wo_q"])
    out = attn_h + inputs
    mean = out.mean(-1, keepdims=True)
    std = jnp.sqrt(((out - mean) ** 2).sum(-1, keepdims=True) / (D - 1))
    ln = params["ln_a"][0] * (out - mean) / (std + 1e-6) + params["ln_b"][0]
    inter = jax.nn.relu(ln @ params["w1"] + params["b1"][0])
    return inter @ params["w2"] + params["b2"][0] + out


if __name__ == "__main__":
    # small, forward-consistent shapes
    B, L = 2, 8
    d_model = feat_vec_size = 32
    d_ff = 64
    num_fac = 4

    key = jax.random.PRNGKey(0)
    ks = jax.random.split(key, 8)

    def bf16_round(x):
        # pre-round so the kernel's bf16 HBM/MXU storage of these tensors is
        # lossless and the f32 reference sees identical operands.
        return x.astype(jnp.bfloat16).astype(jnp.float32)

    inputs = bf16_round(jax.random.normal(ks[0], (B, L, d_model), jnp.float32))
    values = bf16_round(jax.random.normal(ks[1], (B, L, num_fac * d_model),
                                          jnp.float32))
    n = jnp.array([num_fac, num_fac - 1], dtype=jnp.int32)   # valid factor counts

    scale = 0.1
    params = {
        # GlobalAttention.linear_out (2D -> D, bias=False), split into halves,
        # stored [in, out]:
        "wo_c": bf16_round(scale * jax.random.normal(ks[2], (d_model, d_model), jnp.float32)),
        "wo_q": bf16_round(scale * jax.random.normal(ks[3], (d_model, d_model), jnp.float32)),
        # PositionwiseFeedForward
        "w1": bf16_round(scale * jax.random.normal(ks[4], (d_model, d_ff), jnp.float32)),
        "b1": scale * jax.random.normal(ks[5], (1, d_ff), jnp.float32),
        "w2": bf16_round(scale * jax.random.normal(ks[6], (d_ff, d_model), jnp.float32)),
        "b2": scale * jax.random.normal(ks[7], (1, d_model), jnp.float32),
        # onmt LayerNorm params
        "ln_a": jnp.ones((1, d_model), jnp.float32),
        "ln_b": jnp.zeros((1, d_model), jnp.float32),
    }

    out = jax.block_until_ready(lattice_encoder_layer(inputs, values, n, params))
    ref = jax.block_until_ready(reference(inputs, values, n, params))
    # bf16 matmul activations + approx EUP reciprocals vs an f32 reference:
    # bf16-compute tolerances.
    np.testing.assert_allclose(np.asarray(out, dtype=np.float32),
                               np.asarray(ref, dtype=np.float32),
                               rtol=2e-2, atol=2e-2)

    print("KERNEL_OK")
</pallas_src>

<mosaic_0001>
module attributes {stable_mosaic.version = 11 : i64} {
  func.func @_lattice_layer_kernel(%arg0: i32, %arg1: i32, %arg2: memref<2xi32, #tpu.memory_space<smem>>, %arg3: memref<1x8x32xbf16, #tpu.memory_space<vmem>>, %arg4: memref<1x4x8x32xbf16, #tpu.memory_space<vmem>>, %arg5: memref<32x32xbf16, #tpu.memory_space<vmem>>, %arg6: memref<32x32xbf16, #tpu.memory_space<vmem>>, %arg7: memref<32x64xbf16, #tpu.memory_space<vmem>>, %arg8: memref<1x64xf32, #tpu.memory_space<vmem>>, %arg9: memref<64x32xbf16, #tpu.memory_space<vmem>>, %arg10: memref<1x32xf32, #tpu.memory_space<vmem>>, %arg11: memref<1x32xf32, #tpu.memory_space<vmem>>, %arg12: memref<1x32xf32, #tpu.memory_space<vmem>>, %arg13: memref<1x8x32xf32, #tpu.memory_space<vmem>>) attributes {dimension_semantics = [#tpu.dimension_semantics<parallel>, #tpu.dimension_semantics<parallel>], iteration_bounds = array<i64: 2, 1>, scalar_prefetch = 1 : i64, scratch_operands = 0 : i64, tpu.core_type = #tpu.core_type<tc>, window_params = [{transform_indices = @transform_0, window_bounds = array<i64: 1, 8, 32>}, {transform_indices = @transform_1, window_bounds = array<i64: 1, 4, 8, 32>}, {pipeline_mode = #tpu.pipeline_mode<synchronous>, transform_indices = @transform_2, window_bounds = array<i64: 32, 32>}, {pipeline_mode = #tpu.pipeline_mode<synchronous>, transform_indices = @transform_3, window_bounds = array<i64: 32, 32>}, {pipeline_mode = #tpu.pipeline_mode<synchronous>, transform_indices = @transform_4, window_bounds = array<i64: 32, 64>}, {pipeline_mode = #tpu.pipeline_mode<synchronous>, transform_indices = @transform_5, window_bounds = array<i64: 1, 64>}, {pipeline_mode = #tpu.pipeline_mode<synchronous>, transform_indices = @transform_6, window_bounds = array<i64: 64, 32>}, {pipeline_mode = #tpu.pipeline_mode<synchronous>, transform_indices = @transform_7, window_bounds = array<i64: 1, 32>}, {pipeline_mode = #tpu.pipeline_mode<synchronous>, transform_indices = @transform_8, window_bounds = array<i64: 1, 32>}, {pipeline_mode = #tpu.pipeline_mode<synchronous>, transform_indices = @transform_9, window_bounds = array<i64: 1, 32>}, {transform_indices = @transform_10, window_bounds = array<i64: 1, 8, 32>}]} {
    %0 = arith.index_cast %arg0 : i32 to index
    %1 = memref.load %arg2[%0] : memref<2xi32, #tpu.memory_space<smem>>
    %c0 = arith.constant 0 : index
    %c0_0 = arith.constant 0 : index
    %c0_1 = arith.constant 0 : index
    %2 = vector.load %arg3[%c0, %c0_0, %c0_1] : memref<1x8x32xbf16, #tpu.memory_space<vmem>>, vector<1x8x32xbf16>
    %3 = vector.shape_cast %2 : vector<1x8x32xbf16> to vector<8x32xbf16>
    %4 = arith.extf %3 : vector<8x32xbf16> to vector<8x32xf32>
    %cst = arith.constant -1.000000e+30 : f32
    %5 = vector.broadcast %cst : f32 to vector<8x1xf32>
    %c0_2 = arith.constant 0 : index
    %c0_3 = arith.constant 0 : index
    %c0_4 = arith.constant 0 : index
    %c0_5 = arith.constant 0 : index
    %6 = vector.load %arg4[%c0_2, %c0_3, %c0_4, %c0_5] : memref<1x4x8x32xbf16, #tpu.memory_space<vmem>>, vector<1x1x8x32xbf16>
    %7 = vector.shape_cast %6 : vector<1x1x8x32xbf16> to vector<8x32xbf16>
    %8 = arith.extf %7 : vector<8x32xbf16> to vector<8x32xf32>
    %9 = arith.mulf %4, %8 : vector<8x32xf32>
    %cst_6 = arith.constant dense<0.000000e+00> : vector<8xf32>
    %10 = vector.multi_reduction <add>, %9, %cst_6 [1] : vector<8x32xf32> to vector<8xf32>
    %11 = vector.shape_cast %10 : vector<8xf32> to vector<8x1xf32>
    %c0_i32 = arith.constant 0 : i32
    %12 = arith.cmpi sgt, %1, %c0_i32 : i32
    %cst_7 = arith.constant -1.000000e+30 : f32
    %13 = vector.broadcast %cst_7 : f32 to vector<8x1xf32>
    %14 = arith.select %12, %11, %13 : vector<8x1xf32>
    %15 = arith.maximumf %5, %14 : vector<8x1xf32>
    %c0_8 = arith.constant 0 : index
    %c1 = arith.constant 1 : index
    %c0_9 = arith.constant 0 : index
    %c0_10 = arith.constant 0 : index
    %16 = vector.load %arg4[%c0_8, %c1, %c0_9, %c0_10] : memref<1x4x8x32xbf16, #tpu.memory_space<vmem>>, vector<1x1x8x32xbf16>
    %17 = vector.shape_cast %16 : vector<1x1x8x32xbf16> to vector<8x32xbf16>
    %18 = arith.extf %17 : vector<8x32xbf16> to vector<8x32xf32>
    %19 = arith.mulf %4, %18 : vector<8x32xf32>
    %cst_11 = arith.constant dense<0.000000e+00> : vector<8xf32>
    %20 = vector.multi_reduction <add>, %19, %cst_11 [1] : vector<8x32xf32> to vector<8xf32>
    %21 = vector.shape_cast %20 : vector<8xf32> to vector<8x1xf32>
    %c1_i32 = arith.constant 1 : i32
    %22 = arith.cmpi sgt, %1, %c1_i32 : i32
    %cst_12 = arith.constant -1.000000e+30 : f32
    %23 = vector.broadcast %cst_12 : f32 to vector<8x1xf32>
    %24 = arith.select %22, %21, %23 : vector<8x1xf32>
    %25 = arith.maximumf %15, %24 : vector<8x1xf32>
    %c0_13 = arith.constant 0 : index
    %c2 = arith.constant 2 : index
    %c0_14 = arith.constant 0 : index
    %c0_15 = arith.constant 0 : index
    %26 = vector.load %arg4[%c0_13, %c2, %c0_14, %c0_15] : memref<1x4x8x32xbf16, #tpu.memory_space<vmem>>, vector<1x1x8x32xbf16>
    %27 = vector.shape_cast %26 : vector<1x1x8x32xbf16> to vector<8x32xbf16>
    %28 = arith.extf %27 : vector<8x32xbf16> to vector<8x32xf32>
    %29 = arith.mulf %4, %28 : vector<8x32xf32>
    %cst_16 = arith.constant dense<0.000000e+00> : vector<8xf32>
    %30 = vector.multi_reduction <add>, %29, %cst_16 [1] : vector<8x32xf32> to vector<8xf32>
    %31 = vector.shape_cast %30 : vector<8xf32> to vector<8x1xf32>
    %c2_i32 = arith.constant 2 : i32
    %32 = arith.cmpi sgt, %1, %c2_i32 : i32
    %cst_17 = arith.constant -1.000000e+30 : f32
    %33 = vector.broadcast %cst_17 : f32 to vector<8x1xf32>
    %34 = arith.select %32, %31, %33 : vector<8x1xf32>
    %35 = arith.maximumf %25, %34 : vector<8x1xf32>
    %c0_18 = arith.constant 0 : index
    %c3 = arith.constant 3 : index
    %c0_19 = arith.constant 0 : index
    %c0_20 = arith.constant 0 : index
    %36 = vector.load %arg4[%c0_18, %c3, %c0_19, %c0_20] : memref<1x4x8x32xbf16, #tpu.memory_space<vmem>>, vector<1x1x8x32xbf16>
    %37 = vector.shape_cast %36 : vector<1x1x8x32xbf16> to vector<8x32xbf16>
    %38 = arith.extf %37 : vector<8x32xbf16> to vector<8x32xf32>
    %39 = arith.mulf %4, %38 : vector<8x32xf32>
    %cst_21 = arith.constant dense<0.000000e+00> : vector<8xf32>
    %40 = vector.multi_reduction <add>, %39, %cst_21 [1] : vector<8x32xf32> to vector<8xf32>
    %41 = vector.shape_cast %40 : vector<8xf32> to vector<8x1xf32>
    %c3_i32 = arith.constant 3 : i32
    %42 = arith.cmpi sgt, %1, %c3_i32 : i32
    %cst_22 = arith.constant -1.000000e+30 : f32
    %43 = vector.broadcast %cst_22 : f32 to vector<8x1xf32>
    %44 = arith.select %42, %41, %43 : vector<8x1xf32>
    %45 = arith.maximumf %35, %44 : vector<8x1xf32>
    %cst_23 = arith.constant 0.000000e+00 : f32
    %46 = vector.broadcast %cst_23 : f32 to vector<8x1xf32>
    %cst_24 = arith.constant 0.000000e+00 : f32
    %47 = vector.broadcast %cst_24 : f32 to vector<8x32xf32>
    %48 = arith.subf %14, %45 : vector<8x1xf32>
    %49 = math.exp %48 : vector<8x1xf32>
    %50 = arith.addf %46, %49 : vector<8x1xf32>
    %c0_25 = arith.constant 0 : index
    %c0_26 = arith.constant 0 : index
    %c0_27 = arith.constant 0 : index
    %c0_28 = arith.constant 0 : index
    %51 = vector.load %arg4[%c0_25, %c0_26, %c0_27, %c0_28] : memref<1x4x8x32xbf16, #tpu.memory_space<vmem>>, vector<1x1x8x32xbf16>
    %52 = vector.shape_cast %51 : vector<1x1x8x32xbf16> to vector<8x32xbf16>
    %53 = arith.extf %52 : vector<8x32xbf16> to vector<8x32xf32>
    %54 = vector.broadcast %49 : vector<8x1xf32> to vector<8x32xf32>
    %55 = arith.mulf %54, %53 : vector<8x32xf32>
    %56 = arith.addf %47, %55 : vector<8x32xf32>
    %57 = arith.subf %24, %45 : vector<8x1xf32>
    %58 = math.exp %57 : vector<8x1xf32>
    %59 = arith.addf %50, %58 : vector<8x1xf32>
    %c0_29 = arith.constant 0 : index
    %c1_30 = arith.constant 1 : index
    %c0_31 = arith.constant 0 : index
    %c0_32 = arith.constant 0 : index
    %60 = vector.load %arg4[%c0_29, %c1_30, %c0_31, %c0_32] : memref<1x4x8x32xbf16, #tpu.memory_space<vmem>>, vector<1x1x8x32xbf16>
    %61 = vector.shape_cast %60 : vector<1x1x8x32xbf16> to vector<8x32xbf16>
    %62 = arith.extf %61 : vector<8x32xbf16> to vector<8x32xf32>
    %63 = vector.broadcast %58 : vector<8x1xf32> to vector<8x32xf32>
    %64 = arith.mulf %63, %62 : vector<8x32xf32>
    %65 = arith.addf %56, %64 : vector<8x32xf32>
    %66 = arith.subf %34, %45 : vector<8x1xf32>
    %67 = math.exp %66 : vector<8x1xf32>
    %68 = arith.addf %59, %67 : vector<8x1xf32>
    %c0_33 = arith.constant 0 : index
    %c2_34 = arith.constant 2 : index
    %c0_35 = arith.constant 0 : index
    %c0_36 = arith.constant 0 : index
    %69 = vector.load %arg4[%c0_33, %c2_34, %c0_35, %c0_36] : memref<1x4x8x32xbf16, #tpu.memory_space<vmem>>, vector<1x1x8x32xbf16>
    %70 = vector.shape_cast %69 : vector<1x1x8x32xbf16> to vector<8x32xbf16>
    %71 = arith.extf %70 : vector<8x32xbf16> to vector<8x32xf32>
    %72 = vector.broadcast %67 : vector<8x1xf32> to vector<8x32xf32>
    %73 = arith.mulf %72, %71 : vector<8x32xf32>
    %74 = arith.addf %65, %73 : vector<8x32xf32>
    %75 = arith.subf %44, %45 : vector<8x1xf32>
    %76 = math.exp %75 : vector<8x1xf32>
    %77 = arith.addf %68, %76 : vector<8x1xf32>
    %c0_37 = arith.constant 0 : index
    %c3_38 = arith.constant 3 : index
    %c0_39 = arith.constant 0 : index
    %c0_40 = arith.constant 0 : index
    %78 = vector.load %arg4[%c0_37, %c3_38, %c0_39, %c0_40] : memref<1x4x8x32xbf16, #tpu.memory_space<vmem>>, vector<1x1x8x32xbf16>
    %79 = vector.shape_cast %78 : vector<1x1x8x32xbf16> to vector<8x32xbf16>
    %80 = arith.extf %79 : vector<8x32xbf16> to vector<8x32xf32>
    %81 = vector.broadcast %76 : vector<8x1xf32> to vector<8x32xf32>
    %82 = arith.mulf %81, %80 : vector<8x32xf32>
    %83 = arith.addf %74, %82 : vector<8x32xf32>
    %84 = tpu.reciprocal %77 {approx = true} : vector<8x1xf32> -> vector<8x1xf32>
    %85 = vector.broadcast %84 : vector<8x1xf32> to vector<8x32xf32>
    %86 = arith.mulf %83, %85 : vector<8x32xf32>
    %87 = arith.truncf %86 : vector<8x32xf32> to vector<8x32xbf16>
    %c0_41 = arith.constant 0 : index
    %c0_42 = arith.constant 0 : index
    %88 = vector.load %arg5[%c0_41, %c0_42] : memref<32x32xbf16, #tpu.memory_space<vmem>>, vector<32x32xbf16>
    %cst_43 = arith.constant dense<0.000000e+00> : vector<8x32xf32>
    %89 = tpu.matmul %87, %88, %cst_43 {dimension_numbers = #tpu.dot_dimension_numbers<[1], [0], [0], [1], [0, 0, 1, 1], [], []>} : vector<8x32xbf16>, vector<32x32xbf16>, vector<8x32xf32> -> vector<8x32xf32>
    %c0_44 = arith.constant 0 : index
    %c0_45 = arith.constant 0 : index
    %90 = vector.load %arg6[%c0_44, %c0_45] : memref<32x32xbf16, #tpu.memory_space<vmem>>, vector<32x32xbf16>
    %cst_46 = arith.constant dense<0.000000e+00> : vector<8x32xf32>
    %91 = tpu.matmul %3, %90, %cst_46 {dimension_numbers = #tpu.dot_dimension_numbers<[1], [0], [0], [1], [0, 0, 1, 1], [], []>} : vector<8x32xbf16>, vector<32x32xbf16>, vector<8x32xf32> -> vector<8x32xf32>
    %92 = arith.addf %89, %91 : vector<8x32xf32>
    %93 = math.tanh %92 : vector<8x32xf32>
    %94 = arith.addf %93, %4 : vector<8x32xf32>
    %cst_47 = arith.constant dense<0.000000e+00> : vector<8xf32>
    %95 = vector.multi_reduction <add>, %94, %cst_47 [1] : vector<8x32xf32> to vector<8xf32>
    %96 = vector.shape_cast %95 : vector<8xf32> to vector<8x1xf32>
    %cst_48 = arith.constant 3.200000e+01 : f32
    %97 = vector.broadcast %cst_48 : f32 to vector<8x1xf32>
    %98 = arith.divf %96, %97 : vector<8x1xf32>
    %99 = vector.broadcast %98 : vector<8x1xf32> to vector<8x32xf32>
    %100 = arith.subf %94, %99 : vector<8x32xf32>
    %101 = arith.mulf %100, %100 : vector<8x32xf32>
    %cst_49 = arith.constant dense<0.000000e+00> : vector<8xf32>
    %102 = vector.multi_reduction <add>, %101, %cst_49 [1] : vector<8x32xf32> to vector<8xf32>
    %103 = vector.shape_cast %102 : vector<8xf32> to vector<8x1xf32>
    %cst_50 = arith.constant 3.100000e+01 : f32
    %104 = vector.broadcast %cst_50 : f32 to vector<8x1xf32>
    %105 = arith.divf %103, %104 : vector<8x1xf32>
    %106 = math.sqrt %105 : vector<8x1xf32>
    %c0_51 = arith.constant 0 : index
    %c0_52 = arith.constant 0 : index
    %107 = vector.load %arg11[%c0_51, %c0_52] : memref<1x32xf32, #tpu.memory_space<vmem>>, vector<1x32xf32>
    %108 = vector.shape_cast %107 : vector<1x32xf32> to vector<32xf32>
    %109 = vector.shape_cast %108 : vector<32xf32> to vector<1x32xf32>
    %110 = vector.broadcast %109 : vector<1x32xf32> to vector<8x32xf32>
    %111 = arith.mulf %110, %100 : vector<8x32xf32>
    %cst_53 = arith.constant 9.99999997E-7 : f32
    %112 = vector.broadcast %cst_53 : f32 to vector<8x1xf32>
    %113 = arith.addf %106, %112 : vector<8x1xf32>
    %114 = tpu.reciprocal %113 {approx = true} : vector<8x1xf32> -> vector<8x1xf32>
    %115 = vector.broadcast %114 : vector<8x1xf32> to vector<8x32xf32>
    %116 = arith.mulf %111, %115 : vector<8x32xf32>
    %c0_54 = arith.constant 0 : index
    %c0_55 = arith.constant 0 : index
    %117 = vector.load %arg12[%c0_54, %c0_55] : memref<1x32xf32, #tpu.memory_space<vmem>>, vector<1x32xf32>
    %118 = vector.shape_cast %117 : vector<1x32xf32> to vector<32xf32>
    %119 = vector.shape_cast %118 : vector<32xf32> to vector<1x32xf32>
    %120 = vector.broadcast %119 : vector<1x32xf32> to vector<8x32xf32>
    %121 = arith.addf %116, %120 : vector<8x32xf32>
    %122 = arith.truncf %121 : vector<8x32xf32> to vector<8x32xbf16>
    %c0_56 = arith.constant 0 : index
    %c0_57 = arith.constant 0 : index
    %123 = vector.load %arg7[%c0_56, %c0_57] : memref<32x64xbf16, #tpu.memory_space<vmem>>, vector<32x64xbf16>
    %cst_58 = arith.constant dense<0.000000e+00> : vector<8x64xf32>
    %124 = tpu.matmul %122, %123, %cst_58 {dimension_numbers = #tpu.dot_dimension_numbers<[1], [0], [0], [1], [0, 0, 1, 1], [], []>} : vector<8x32xbf16>, vector<32x64xbf16>, vector<8x64xf32> -> vector<8x64xf32>
    %c0_59 = arith.constant 0 : index
    %c0_60 = arith.constant 0 : index
    %125 = vector.load %arg8[%c0_59, %c0_60] : memref<1x64xf32, #tpu.memory_space<vmem>>, vector<1x64xf32>
    %126 = vector.shape_cast %125 : vector<1x64xf32> to vector<64xf32>
    %127 = vector.shape_cast %126 : vector<64xf32> to vector<1x64xf32>
    %128 = vector.broadcast %127 : vector<1x64xf32> to vector<8x64xf32>
    %129 = arith.addf %124, %128 : vector<8x64xf32>
    %cst_61 = arith.constant 0.000000e+00 : f32
    %130 = vector.broadcast %cst_61 : f32 to vector<8x64xf32>
    %131 = arith.maximumf %129, %130 : vector<8x64xf32>
    %132 = arith.truncf %131 : vector<8x64xf32> to vector<8x64xbf16>
    %c0_62 = arith.constant 0 : index
    %c0_63 = arith.constant 0 : index
    %133 = vector.load %arg9[%c0_62, %c0_63] : memref<64x32xbf16, #tpu.memory_space<vmem>>, vector<64x32xbf16>
    %cst_64 = arith.constant dense<0.000000e+00> : vector<8x32xf32>
    %134 = tpu.matmul %132, %133, %cst_64 {dimension_numbers = #tpu.dot_dimension_numbers<[1], [0], [0], [1], [0, 0, 1, 1], [], []>} : vector<8x64xbf16>, vector<64x32xbf16>, vector<8x32xf32> -> vector<8x32xf32>
    %c0_65 = arith.constant 0 : index
    %c0_66 = arith.constant 0 : index
    %135 = vector.load %arg10[%c0_65, %c0_66] : memref<1x32xf32, #tpu.memory_space<vmem>>, vector<1x32xf32>
    %136 = vector.shape_cast %135 : vector<1x32xf32> to vector<32xf32>
    %137 = vector.shape_cast %136 : vector<32xf32> to vector<1x32xf32>
    %138 = vector.broadcast %137 : vector<1x32xf32> to vector<8x32xf32>
    %139 = arith.addf %134, %138 : vector<8x32xf32>
    %140 = arith.addf %139, %94 : vector<8x32xf32>
    %c0_67 = arith.constant 0 : index
    %c0_68 = arith.constant 0 : index
    %c0_69 = arith.constant 0 : index
    %141 = vector.load %arg13[%c0_67, %c0_68, %c0_69] : memref<1x8x32xf32, #tpu.memory_space<vmem>>, vector<1x8x32xf32>
    %142 = vector.shape_cast %141 : vector<1x8x32xf32> to vector<8x32xf32>
    %143 = vector.shape_cast %140 : vector<8x32xf32> to vector<1x8x32xf32>
    tpu.vector_store %arg13[%c0_67, %c0_68, %c0_69], %143 {strides = array<i32>} : memref<1x8x32xf32, #tpu.memory_space<vmem>>, vector<1x8x32xf32>,
    return
  }
  func.func @transform_0(%arg0: i32, %arg1: i32, %arg2: memref<2xi32, #tpu.memory_space<smem>>) -> (i32, i32, i32) {
    %c0_i32 = arith.constant 0 : i32
    %c0_i32_0 = arith.constant 0 : i32
    return %arg0, %arg1, %c0_i32 : i32, i32, i32
  }
  func.func @transform_1(%arg0: i32, %arg1: i32, %arg2: memref<2xi32, #tpu.memory_space<smem>>) -> (i32, i32, i32, i32) {
    %c0_i32 = arith.constant 0 : i32
    %c0_i32_0 = arith.constant 0 : i32
    %c0_i32_1 = arith.constant 0 : i32
    return %arg0, %c0_i32, %arg1, %c0_i32_0 : i32, i32, i32, i32
  }
  func.func @transform_2(%arg0: i32, %arg1: i32, %arg2: memref<2xi32, #tpu.memory_space<smem>>) -> (i32, i32) {
    %c0_i32 = arith.constant 0 : i32
    %c0_i32_0 = arith.constant 0 : i32
    %c0_i32_1 = arith.constant 0 : i32
    return %c0_i32, %c0_i32_0 : i32, i32
  }
  func.func @transform_3(%arg0: i32, %arg1: i32, %arg2: memref<2xi32, #tpu.memory_space<smem>>) -> (i32, i32) {
    %c0_i32 = arith.constant 0 : i32
    %c0_i32_0 = arith.constant 0 : i32
    %c0_i32_1 = arith.constant 0 : i32
    return %c0_i32, %c0_i32_0 : i32, i32
  }
  func.func @transform_4(%arg0: i32, %arg1: i32, %arg2: memref<2xi32, #tpu.memory_space<smem>>) -> (i32, i32) {
    %c0_i32 = arith.constant 0 : i32
    %c0_i32_0 = arith.constant 0 : i32
    %c0_i32_1 = arith.constant 0 : i32
    return %c0_i32, %c0_i32_0 : i32, i32
  }
  func.func @transform_5(%arg0: i32, %arg1: i32, %arg2: memref<2xi32, #tpu.memory_space<smem>>) -> (i32, i32) {
    %c0_i32 = arith.constant 0 : i32
    %c0_i32_0 = arith.constant 0 : i32
    %c0_i32_1 = arith.constant 0 : i32
    return %c0_i32, %c0_i32_0 : i32, i32
  }
  func.func @transform_6(%arg0: i32, %arg1: i32, %arg2: memref<2xi32, #tpu.memory_space<smem>>) -> (i32, i32) {
    %c0_i32 = arith.constant 0 : i32
    %c0_i32_0 = arith.constant 0 : i32
    %c0_i32_1 = arith.constant 0 : i32
    return %c0_i32, %c0_i32_0 : i32, i32
  }
  func.func @transform_7(%arg0: i32, %arg1: i32, %arg2: memref<2xi32, #tpu.memory_space<smem>>) -> (i32, i32) {
    %c0_i32 = arith.constant 0 : i32
    %c0_i32_0 = arith.constant 0 : i32
    %c0_i32_1 = arith.constant 0 : i32
    return %c0_i32, %c0_i32_0 : i32, i32
  }
  func.func @transform_8(%arg0: i32, %arg1: i32, %arg2: memref<2xi32, #tpu.memory_space<smem>>) -> (i32, i32) {
    %c0_i32 = arith.constant 0 : i32
    %c0_i32_0 = arith.constant 0 : i32
    %c0_i32_1 = arith.constant 0 : i32
    return %c0_i32, %c0_i32_0 : i32, i32
  }
  func.func @transform_9(%arg0: i32, %arg1: i32, %arg2: memref<2xi32, #tpu.memory_space<smem>>) -> (i32, i32) {
    %c0_i32 = arith.constant 0 : i32
    %c0_i32_0 = arith.constant 0 : i32
    %c0_i32_1 = arith.constant 0 : i32
    return %c0_i32, %c0_i32_0 : i32, i32
  }
  func.func @transform_10(%arg0: i32, %arg1: i32, %arg2: memref<2xi32, #tpu.memory_space<smem>>) -> (i32, i32, i32) {
    %c0_i32 = arith.constant 0 : i32
    %c0_i32_0 = arith.constant 0 : i32
    return %arg0, %arg1, %c0_i32 : i32, i32, i32
  }
}

</mosaic_0001>

<llo_original>
// kernel: tpu_custom_call.1
$region0: #{tpu_custom_call.1}
  #allocation0 [shape = 'u32[]', space=smem, size = 0x4, offset = 0x4, fixed_abs, tag = 'smem constant byte address 0x4 - core index']
  #allocation1 [shape = 'u32[144,128]{1,0:T(1,128)}', space=vmem, size = 0x12000, scoped, tag = 'internal scratch']
  #allocation2 [shape = 's32[1]{0}', space=sflag, size = 0x4, scoped, tag = 'scoped memory for tpu_custom_call.1']
  #allocation3 [shape = 'u8[512]{0}', space=smem, size = 0x200, scoped, tag = 'prefetched SMEM operand 0']
  %s0 = inlined_call_operand.vmem [shape: s32[2], index: 0, kind: input, shape index: {}]
  %s1 = inlined_call_operand.hbm [shape: bf16[2,8,32], index: 1, kind: input, shape index: {}]
  %s2 = inlined_call_operand.vmem [shape: bf16[2,4,8,32], index: 2, kind: input, shape index: {}]
  %s3 = inlined_call_operand.vmem [shape: bf16[32,32], index: 3, kind: input, shape index: {}]
  %s4 = inlined_call_operand.hbm [shape: bf16[32,32], index: 4, kind: input, shape index: {}]
  %s5 = inlined_call_operand.hbm [shape: bf16[32,64], index: 5, kind: input, shape index: {}]
  %s6 = inlined_call_operand.vmem [shape: f32[1,64], index: 6, kind: input, shape index: {}]
  %s7 = inlined_call_operand.vmem [shape: bf16[64,32], index: 7, kind: input, shape index: {}]
  %s8 = inlined_call_operand.vmem [shape: f32[1,32], index: 8, kind: input, shape index: {}]
  %s9 = inlined_call_operand.vmem [shape: f32[1,32], index: 9, kind: input, shape index: {}]
  %s10 = inlined_call_operand.vmem [shape: f32[1,32], index: 10, kind: input, shape index: {}]
  %s11 = inlined_call_operand.hbm [shape: f32[2,8,32], index: 11, kind: output, shape index: {}]
  %s12 = sld [smem:[#allocation0]]
  $region85: #{tpu_custom_call.1} parent=0
    _
  %s14 = ssub.s32 1, %s12
  %s15 = scalar_select 0, %s14, %s12
  %s16 = sshll.u32 %s0, 4
  %s17 = int_to_ptr.vmem [resolvable:$true] %s16
  %19 = dma.vmem_to_smem %s17, 16, [#allocation3], [#allocation2]
  %20 = dma.done [#allocation2], 16
  %21 = sfence
  $region1: #{tpu_custom_call.1} parent=0
    #allocation4 [shape = 'u8[4096]{0}', space=vmem, size = 0x1000, scoped, tag = 'input window, operand 1']
    #allocation5 [shape = 's32[2]{0}', space=sflag, size = 0x8, scoped, tag = 'scoped memory for tpu_custom_call.1']
    #allocation6 [shape = 's32[2]{0}', space=sflag, size = 0x8, scoped, tag = 'scoped memory for tpu_custom_call.1']
    #allocation7 [shape = 'u8[8192]{0}', space=vmem, size = 0x2000, scoped, tag = 'input window, operand 4, single buffered']
    #allocation8 [shape = 's32[1]{0}', space=sflag, size = 0x4, scoped, tag = 'scoped memory for tpu_custom_call.1']
    #allocation9 [shape = 'u8[8192]{0}', space=vmem, size = 0x2000, scoped, tag = 'input window, operand 5, single buffered']
    #allocation10 [shape = 'u8[8192]{0}', space=vmem, size = 0x2000, scoped, tag = 'output window, operand 0']
    %22 = vsyncpa [#allocation5], 0
    %s23 = scalar_lea.sflag [#allocation5], 1
    %24 = vsyncpa %s23, 0
    %25 = vsyncpa [#allocation8], 0
    %26 = vsyncpa [#allocation6], 0
    %s27 = scalar_lea.sflag [#allocation6], 1
    %28 = vsyncpa %s27, 0
    loop: start=0, step=1, limit=4
    $region2: #{tpu_custom_call.1} parent=1 // loop_pre_header
      _
    $region3: #{tpu_custom_call.1} parent=1 // loop_header
      %s30 = sphi 0, %s34
      %p31 = scmp.ge.s32.totalorder %s30, 4
      %s37 = sphi 0, %s49
      %s38 = sphi 0, %s45
      %s39 = sphi 0, %s37
      %s40 = sphi 0, %s38
      %s41 = sphi 0, %s39
      %s42 = sphi 0, %s40
      %s54 = sphi 0, %s56
      %s57 = sphi 0, %s54
      %s58 = sphi 0, %s57
      %s74 = sphi 0, %s58
      %s82 = sphi 0, %s84
      %s85 = sphi 0, %s82
      %s86 = sphi 0, %s85
      %s102 = sphi 0, %s86
      %s106 = sphi 0, %s106
      %s108 = sphi 0, %s106
      %s109 = sphi 0, %s108
      %s123 = sphi 0, %s109
      %s127 = sphi 0, %s127
      %s129 = sphi 0, %s127
      %s130 = sphi 0, %s129
      %s144 = sphi 0, %s130
      %s148 = sphi 0, %s148
      %s150 = sphi 0, %s148
      %s151 = sphi 0, %s150
      %s165 = sphi 0, %s151
      %s169 = sphi 0, %s169
      %s171 = sphi 0, %s169
      %s172 = sphi 0, %s171
      %s186 = sphi 0, %s172
      %s190 = sphi 0, %s190
      %s192 = sphi 0, %s190
      %s193 = sphi 0, %s192
      %s207 = sphi 0, %s193
      %s211 = sphi 0, %s211
      %s213 = sphi 0, %s211
      %s214 = sphi 0, %s213
      %s228 = sphi 0, %s214
      %s232 = sphi 0, %s232
      %s234 = sphi 0, %s232
      %s235 = sphi 0, %s234
      %s249 = sphi 0, %s235
      %s253 = sphi 0, %s253
      %s255 = sphi 0, %s253
      %s256 = sphi 0, %s255
      %s270 = sphi 0, %s256
      %s278 = sphi 0, %s280
      %s281 = sphi 0, %s278
      %s282 = sphi 0, %s281
      %s298 = sphi 0, %s282
    $region4: #{tpu_custom_call.1} parent=1 // loop_header_branch
      %33 = sbr.rel (%p31) target = $region8
    $region5: #{tpu_custom_call.1} parent=1 // loop_body
      %s35 = ssub.s32 %s30, 1
      %s36 = ssub.s32 %s30, 2
      %s43 = sadd.s32 1, %s38
      %p44 = scmp.ge.s32.totalorder %s43, 1
      %s45 = scalar_select %p44, 0, %s43
      %s46 = sadd.s32 1, %s37
      %s47 = scalar_select %p44, %s46, %s37
      %p48 = scmp.ge.s32.totalorder %s47, 2
      %s49 = scalar_select %p48, 0, %s47
      %s50 = ssub.s32 %s37, %s49
      %s51 = ssub.s32 %s38, %s45
      %s52 = sor.u32 %s50, %s51
      %p53 = scmp.eq.s32.totalorder %s52, 0
      %s55 = sadd.s32 %s54, 1
      %s56 = scalar_select %p53, %s54, %s55
      %p59 = pneg %p53
      %p60 = scmp.eq.s32.totalorder %s30, 1
      %p61 = por %p59, %p60
      %p62 = scmp.ne.s32.totalorder %s54, %s57
      %p63 = scmp.eq.s32.totalorder %s30, 0
      %p64 = por %p62, %p63
      %p65 = scmp.ne.s32.totalorder %s54, %s57
      %p66 = scmp.eq.s32.totalorder %s35, 1
      %p67 = por %p65, %p66
      %p68 = scmp.ne.s32.totalorder %s57, %s58
      %p69 = scmp.eq.s32.totalorder %s35, 0
      %p70 = por %p68, %p69
      %p71 = scmp.ne.s32.totalorder %s57, %s58
      %p72 = scmp.eq.s32.totalorder %s36, 1
      %p73 = por %p71, %p72
      %p75 = scmp.ne.s32.totalorder %s58, %s74
      %p76 = scmp.eq.s32.totalorder %s36, 0
      %p77 = por %p75, %p76
      %s78 = ssub.s32 %s37, %s49
      %s79 = ssub.s32 %s38, %s45
      %s80 = sor.u32 %s78, %s79
      %p81 = scmp.eq.s32.totalorder %s80, 0
      %s83 = sadd.s32 %s82, 1
      %s84 = scalar_select %p81, %s82, %s83
      %p87 = pneg %p81
      %p88 = scmp.eq.s32.totalorder %s30, 1
      %p89 = por %p87, %p88
      %p90 = scmp.ne.s32.totalorder %s82, %s85
      %p91 = scmp.eq.s32.totalorder %s30, 0
      %p92 = por %p90, %p91
      %p93 = scmp.ne.s32.totalorder %s82, %s85
      %p94 = scmp.eq.s32.totalorder %s35, 1
      %p95 = por %p93, %p94
      %p96 = scmp.ne.s32.totalorder %s85, %s86
      %p97 = scmp.eq.s32.totalorder %s35, 0
      %p98 = por %p96, %p97
      %p99 = scmp.ne.s32.totalorder %s85, %s86
      %p100 = scmp.eq.s32.totalorder %s36, 1
      %p101 = por %p99, %p100
      %p103 = scmp.ne.s32.totalorder %s86, %s102
      %p104 = scmp.eq.s32.totalorder %s36, 0
      %p105 = por %p103, %p104
      %s107 = sadd.s32 %s106, 1
      %p110 = scmp.eq.s32.totalorder %s30, 1
      %p111 = scmp.ne.s32.totalorder %s106, %s108
      %p112 = scmp.eq.s32.totalorder %s30, 0
      %p113 = por %p111, %p112
      %p114 = scmp.ne.s32.totalorder %s106, %s108
      %p115 = scmp.eq.s32.totalorder %s35, 1
      %p116 = por %p114, %p115
      %p117 = scmp.ne.s32.totalorder %s108, %s109
      %p118 = scmp.eq.s32.totalorder %s35, 0
      %p119 = por %p117, %p118
      %p120 = scmp.ne.s32.totalorder %s108, %s109
      %p121 = scmp.eq.s32.totalorder %s36, 1
      %p122 = por %p120, %p121
      %p124 = scmp.ne.s32.totalorder %s109, %s123
      %p125 = scmp.eq.s32.totalorder %s36, 0
      %p126 = por %p124, %p125
      %s128 = sadd.s32 %s127, 1
      %p131 = scmp.eq.s32.totalorder %s30, 1
      %p132 = scmp.ne.s32.totalorder %s127, %s129
      %p133 = scmp.eq.s32.totalorder %s30, 0
      %p134 = por %p132, %p133
      %p135 = scmp.ne.s32.totalorder %s127, %s129
      %p136 = scmp.eq.s32.totalorder %s35, 1
      %p137 = por %p135, %p136
      %p138 = scmp.ne.s32.totalorder %s129, %s130
      %p139 = scmp.eq.s32.totalorder %s35, 0
      %p140 = por %p138, %p139
      %p141 = scmp.ne.s32.totalorder %s129, %s130
      %p142 = scmp.eq.s32.totalorder %s36, 1
      %p143 = por %p141, %p142
      %p145 = scmp.ne.s32.totalorder %s130, %s144
      %p146 = scmp.eq.s32.totalorder %s36, 0
      %p147 = por %p145, %p146
      %s149 = sadd.s32 %s148, 1
      %p152 = scmp.eq.s32.totalorder %s30, 1
      %p153 = scmp.ne.s32.totalorder %s148, %s150
      %p154 = scmp.eq.s32.totalorder %s30, 0
      %p155 = por %p153, %p154
      %p156 = scmp.ne.s32.totalorder %s148, %s150
      %p157 = scmp.eq.s32.totalorder %s35, 1
      %p158 = por %p156, %p157
      %p159 = scmp.ne.s32.totalorder %s150, %s151
      %p160 = scmp.eq.s32.totalorder %s35, 0
      %p161 = por %p159, %p160
      %p162 = scmp.ne.s32.totalorder %s150, %s151
      %p163 = scmp.eq.s32.totalorder %s36, 1
      %p164 = por %p162, %p163
      %p166 = scmp.ne.s32.totalorder %s151, %s165
      %p167 = scmp.eq.s32.totalorder %s36, 0
      %p168 = por %p166, %p167
      %s170 = sadd.s32 %s169, 1
      %p173 = scmp.eq.s32.totalorder %s30, 1
      %p174 = scmp.ne.s32.totalorder %s169, %s171
      %p175 = scmp.eq.s32.totalorder %s30, 0
      %p176 = por %p174, %p175
      %p177 = scmp.ne.s32.totalorder %s169, %s171
      %p178 = scmp.eq.s32.totalorder %s35, 1
      %p179 = por %p177, %p178
      %p180 = scmp.ne.s32.totalorder %s171, %s172
      %p181 = scmp.eq.s32.totalorder %s35, 0
      %p182 = por %p180, %p181
      %p183 = scmp.ne.s32.totalorder %s171, %s172
      %p184 = scmp.eq.s32.totalorder %s36, 1
      %p185 = por %p183, %p184
      %p187 = scmp.ne.s32.totalorder %s172, %s186
      %p188 = scmp.eq.s32.totalorder %s36, 0
      %p189 = por %p187, %p188
      %s191 = sadd.s32 %s190, 1
      %p194 = scmp.eq.s32.totalorder %s30, 1
      %p195 = scmp.ne.s32.totalorder %s190, %s192
      %p196 = scmp.eq.s32.totalorder %s30, 0
      %p197 = por %p195, %p196
      %p198 = scmp.ne.s32.totalorder %s190, %s192
      %p199 = scmp.eq.s32.totalorder %s35, 1
      %p200 = por %p198, %p199
      %p201 = scmp.ne.s32.totalorder %s192, %s193
      %p202 = scmp.eq.s32.totalorder %s35, 0
      %p203 = por %p201, %p202
      %p204 = scmp.ne.s32.totalorder %s192, %s193
      %p205 = scmp.eq.s32.totalorder %s36, 1
      %p206 = por %p204, %p205
      %p208 = scmp.ne.s32.totalorder %s193, %s207
      %p209 = scmp.eq.s32.totalorder %s36, 0
      %p210 = por %p208, %p209
      %s212 = sadd.s32 %s211, 1
      %p215 = scmp.eq.s32.totalorder %s30, 1
      %p216 = scmp.ne.s32.totalorder %s211, %s213
      %p217 = scmp.eq.s32.totalorder %s30, 0
      %p218 = por %p216, %p217
      %p219 = scmp.ne.s32.totalorder %s211, %s213
      %p220 = scmp.eq.s32.totalorder %s35, 1
      %p221 = por %p219, %p220
      %p222 = scmp.ne.s32.totalorder %s213, %s214
      %p223 = scmp.eq.s32.totalorder %s35, 0
      %p224 = por %p222, %p223
      %p225 = scmp.ne.s32.totalorder %s213, %s214
      %p226 = scmp.eq.s32.totalorder %s36, 1
      %p227 = por %p225, %p226
      %p229 = scmp.ne.s32.totalorder %s214, %s228
      %p230 = scmp.eq.s32.totalorder %s36, 0
      %p231 = por %p229, %p230
      %s233 = sadd.s32 %s232, 1
      %p236 = scmp.eq.s32.totalorder %s30, 1
      %p237 = scmp.ne.s32.totalorder %s232, %s234
      %p238 = scmp.eq.s32.totalorder %s30, 0
      %p239 = por %p237, %p238
      %p240 = scmp.ne.s32.totalorder %s232, %s234
      %p241 = scmp.eq.s32.totalorder %s35, 1
      %p242 = por %p240, %p241
      %p243 = scmp.ne.s32.totalorder %s234, %s235
      %p244 = scmp.eq.s32.totalorder %s35, 0
      %p245 = por %p243, %p244
      %p246 = scmp.ne.s32.totalorder %s234, %s235
      %p247 = scmp.eq.s32.totalorder %s36, 1
      %p248 = por %p246, %p247
      %p250 = scmp.ne.s32.totalorder %s235, %s249
      %p251 = scmp.eq.s32.totalorder %s36, 0
      %p252 = por %p250, %p251
      %s254 = sadd.s32 %s253, 1
      %p257 = scmp.eq.s32.totalorder %s30, 1
      %p258 = scmp.ne.s32.totalorder %s253, %s255
      %p259 = scmp.eq.s32.totalorder %s30, 0
      %p260 = por %p258, %p259
      %p261 = scmp.ne.s32.totalorder %s253, %s255
      %p262 = scmp.eq.s32.totalorder %s35, 1
      %p263 = por %p261, %p262
      %p264 = scmp.ne.s32.totalorder %s255, %s256
      %p265 = scmp.eq.s32.totalorder %s35, 0
      %p266 = por %p264, %p265
      %p267 = scmp.ne.s32.totalorder %s255, %s256
      %p268 = scmp.eq.s32.totalorder %s36, 1
      %p269 = por %p267, %p268
      %p271 = scmp.ne.s32.totalorder %s256, %s270
      %p272 = scmp.eq.s32.totalorder %s36, 0
      %p273 = por %p271, %p272
      %s274 = ssub.s32 %s37, %s49
      %s275 = ssub.s32 %s38, %s45
      %s276 = sor.u32 %s274, %s275
      %p277 = scmp.eq.s32.totalorder %s276, 0
      %s279 = sadd.s32 %s278, 1
      %s280 = scalar_select %p277, %s278, %s279
      %p283 = pneg %p277
      %p284 = scmp.eq.s32.totalorder %s30, 1
      %p285 = por %p283, %p284
      %p286 = scmp.ne.s32.totalorder %s278, %s281
      %p287 = scmp.eq.s32.totalorder %s30, 0
      %p288 = por %p286, %p287
      %p289 = scmp.ne.s32.totalorder %s278, %s281
      %p290 = scmp.eq.s32.totalorder %s35, 1
      %p291 = por %p289, %p290
      %p292 = scmp.ne.s32.totalorder %s281, %s282
      %p293 = scmp.eq.s32.totalorder %s35, 0
      %p294 = por %p292, %p293
      %p295 = scmp.ne.s32.totalorder %s281, %s282
      %p296 = scmp.eq.s32.totalorder %s36, 1
      %p297 = por %p295, %p296
      %p299 = scmp.ne.s32.totalorder %s282, %s298
      %p300 = scmp.eq.s32.totalorder %s36, 0
      %p301 = por %p299, %p300
      %p302 = scmp.le.s32.totalorder 1, %s30
      %p303 = scmp.lt.s32.totalorder %s30, 3
      %p304 = pnand %p302, %p303
      %p305 = pneg %p304
      // Predicated region
      $region9: #{tpu_custom_call.1} parent=5 // pred_check
        _
      $region10: #{tpu_custom_call.1} parent=5 // pred_check_branch
        %307 = sbr.rel (%p304) target = $region12
      $region11: #{tpu_custom_call.1} parent=5 // pred_region
        %s308 = ssub.s32 %s30, 1
        // Predicated region
        $region13: #{tpu_custom_call.1} parent=11 // pred_check
          %p309 = pneg %p119
        $region14: #{tpu_custom_call.1} parent=11 // pred_check_branch
          %311 = sbr.rel (%p309) target = $region16
        $region15: #{tpu_custom_call.1} parent=11 // pred_region
          _
        $region16: #{tpu_custom_call.1} parent=11 // pred_fallthru
          _
        // Predicated region
        $region17: #{tpu_custom_call.1} parent=11 // pred_check
          %p312 = pneg %p140
        $region18: #{tpu_custom_call.1} parent=11 // pred_check_branch
          %314 = sbr.rel (%p312) target = $region20
        $region19: #{tpu_custom_call.1} parent=11 // pred_region
          %s316 = ssub.s32 256, 256
          %317 = vsyncadd [#allocation8], %s316
          %s318 = sshll.u32 [#allocation7], 4
          %s319 = int_to_ptr.vmem [resolvable:$true] %s318
          %324 = dma.hbm_to_vmem [thread:$0]  %s4, 256, %s319, [#allocation8], 64, 64, 4
        $region20: #{tpu_custom_call.1} parent=11 // pred_fallthru
          _
        // Predicated region
        $region21: #{tpu_custom_call.1} parent=11 // pred_check
          %p325 = pneg %p161
        $region22: #{tpu_custom_call.1} parent=11 // pred_check_branch
          %327 = sbr.rel (%p325) target = $region24
        $region23: #{tpu_custom_call.1} parent=11 // pred_region
          %s329 = ssub.s32 256, 256
          %330 = vsyncadd [#allocation8], %s329
          %s331 = sshll.u32 [#allocation9], 4
          %s332 = int_to_ptr.vmem [resolvable:$true] %s331
          %337 = dma.hbm_to_vmem [thread:$0]  %s5, 256, %s332, [#allocation8], 64, 64, 4
        $region24: #{tpu_custom_call.1} parent=11 // pred_fallthru
          _
        // Predicated region
        $region25: #{tpu_custom_call.1} parent=11 // pred_check
          %p338 = pneg %p182
        $region26: #{tpu_custom_call.1} parent=11 // pred_check_branch
          %340 = sbr.rel (%p338) target = $region28
        $region27: #{tpu_custom_call.1} parent=11 // pred_region
          _
        $region28: #{tpu_custom_call.1} parent=11 // pred_fallthru
          _
        // Predicated region
        $region29: #{tpu_custom_call.1} parent=11 // pred_check
          %p341 = pneg %p203
        $region30: #{tpu_custom_call.1} parent=11 // pred_check_branch
          %343 = sbr.rel (%p341) target = $region32
        $region31: #{tpu_custom_call.1} parent=11 // pred_region
          _
        $region32: #{tpu_custom_call.1} parent=11 // pred_fallthru
          _
        // Predicated region
        $region33: #{tpu_custom_call.1} parent=11 // pred_check
          %p344 = pneg %p224
        $region34: #{tpu_custom_call.1} parent=11 // pred_check_branch
          %346 = sbr.rel (%p344) target = $region36
        $region35: #{tpu_custom_call.1} parent=11 // pred_region
          _
        $region36: #{tpu_custom_call.1} parent=11 // pred_fallthru
          _
        // Predicated region
        $region37: #{tpu_custom_call.1} parent=11 // pred_check
          %p347 = pneg %p245
        $region38: #{tpu_custom_call.1} parent=11 // pred_check_branch
          %349 = sbr.rel (%p347) target = $region40
        $region39: #{tpu_custom_call.1} parent=11 // pred_region
          _
        $region40: #{tpu_custom_call.1} parent=11 // pred_fallthru
          _
        // Predicated region
        $region41: #{tpu_custom_call.1} parent=11 // pred_check
          %p350 = pneg %p266
        $region42: #{tpu_custom_call.1} parent=11 // pred_check_branch
          %352 = sbr.rel (%p350) target = $region44
        $region43: #{tpu_custom_call.1} parent=11 // pred_region
          _
        $region44: #{tpu_custom_call.1} parent=11 // pred_fallthru
          _
      $region12: #{tpu_custom_call.1} parent=5 // pred_fallthru
        _
      %p353 = scmp.lt.s32.totalorder %s30, 2
      // Predicated region
      $region45: #{tpu_custom_call.1} parent=5 // pred_check
        %p354 = pneg %p353
      $region46: #{tpu_custom_call.1} parent=5 // pred_check_branch
        %356 = sbr.rel (%p354) target = $region48
      $region47: #{tpu_custom_call.1} parent=5 // pred_region
        // Predicated region
        $region49: #{tpu_custom_call.1} parent=47 // pred_check
          %p357 = pneg %p64
        $region50: #{tpu_custom_call.1} parent=47 // pred_check_branch
          %359 = sbr.rel (%p357) target = $region52
        $region51: #{tpu_custom_call.1} parent=47 // pred_region
          %s360 = sand.u32 %s54, 1
          %s361 = scalar_lea.sflag [#allocation5], %s360
          %s362 = sand.u32 %s54, 1
          %s363 = smul.addr %s362, 4
          %s364 = scalar_lea.vmem [#allocation4], %s363
          %s366 = ssub.s32 64, 64
          %367 = vsyncadd %s361, %s366
          %s368 = sadd.s32 %s38, %s37
          %s369 = smul.addr %s368, 64
          %s370 = scalar_lea.hbm %s1, %s369
          %s372 = sshll.u32 %s364, 4
          %s373 = int_to_ptr.vmem [resolvable:$true] %s372
          %375 = dma.hbm_to_vmem [thread:$0]  %s370, 64, %s373, %s361
        $region52: #{tpu_custom_call.1} parent=47 // pred_fallthru
          _
        // Predicated region
        $region53: #{tpu_custom_call.1} parent=47 // pred_check
          %p376 = pneg %p92
        $region54: #{tpu_custom_call.1} parent=47 // pred_check_branch
          %378 = sbr.rel (%p376) target = $region56
        $region55: #{tpu_custom_call.1} parent=47 // pred_region
          %p379 = scmp.lt.s32.totalorder %s37, 1
          %s380 = scalar_select %p379, %s37, 1
          %p381 = scmp.lt.s32.totalorder %s38, 0
          %s382 = scalar_select %p381, %s38, 0
          %s383 = smul.addr %s380, 4
          %s384 = sadd.s32 %s382, %s383
          %s385 = smul.addr %s384, 4
          %s386 = scalar_lea.vmem %s2, %s385
        $region56: #{tpu_custom_call.1} parent=47 // pred_fallthru
          _
      $region48: #{tpu_custom_call.1} parent=5 // pred_fallthru
        _
      %p387 = scmp.le.s32.totalorder 1, %s30
      %p388 = scmp.lt.s32.totalorder %s30, 3
      %p389 = pnand %p387, %p388
      %p390 = pneg %p389
      // Predicated region
      $region57: #{tpu_custom_call.1} parent=5 // pred_check
        _
      $region58: #{tpu_custom_call.1} parent=5 // pred_check_branch
        %392 = sbr.rel (%p389) target = $region60
      $region59: #{tpu_custom_call.1} parent=5 // pred_region
        %s393 = ssub.s32 %s30, 1
        %s394 = sand.u32 %s57, 1
        %s395 = scalar_lea.sflag [#allocation5], %s394
        %s396 = sand.u32 %s57, 1
        %s397 = smul.addr %s396, 4
        %s398 = scalar_lea.vmem [#allocation4], %s397
        // Predicated region
        $region61: #{tpu_custom_call.1} parent=59 // pred_check
          %p399 = pneg %p70
        $region62: #{tpu_custom_call.1} parent=59 // pred_check_branch
          %401 = sbr.rel (%p399) target = $region64
        $region63: #{tpu_custom_call.1} parent=59 // pred_region
          %402 = dma.done %s395, 64
        $region64: #{tpu_custom_call.1} parent=59 // pred_fallthru
          _
        // Predicated region
        $region65: #{tpu_custom_call.1} parent=59 // pred_check
          %p403 = pneg %p140
        $region66: #{tpu_custom_call.1} parent=59 // pred_check_branch
          %405 = sbr.rel (%p403) target = $region68
        $region67: #{tpu_custom_call.1} parent=59 // pred_region
          %406 = dma.done [#allocation8], 256
        $region68: #{tpu_custom_call.1} parent=59 // pred_fallthru
          _
        // Predicated region
        $region69: #{tpu_custom_call.1} parent=59 // pred_check
          %p407 = pneg %p161
        $region70: #{tpu_custom_call.1} parent=59 // pred_check_branch
          %409 = sbr.rel (%p407) target = $region72
        $region71: #{tpu_custom_call.1} parent=59 // pred_region
          %410 = dma.done [#allocation8], 256
        $region72: #{tpu_custom_call.1} parent=59 // pred_fallthru
          _
        %s411 = sand.u32 %s57, 1
        %s412 = scalar_lea.sflag [#allocation5], %s411
        %s413 = sand.u32 %s57, 1
        %s414 = smul.addr %s413, 4
        %s415 = scalar_lea.vmem [#allocation4], %s414
        %p416 = pneg %p70
        %p417 = pneg %p67
        %p418 = scmp.lt.s32.totalorder %s39, 1
        %s419 = scalar_select %p418, %s39, 1
        %p420 = scmp.lt.s32.totalorder %s40, 0
        %s421 = scalar_select %p420, %s40, 0
        %s422 = smul.addr %s419, 4
        %s423 = sadd.s32 %s421, %s422
        %s424 = smul.addr %s423, 4
        %s425 = scalar_lea.vmem %s2, %s424
        %p426 = pneg %p98
        %p427 = pneg %p95
        %p428 = pneg %p119
        %p429 = pneg %p116
        %p430 = pneg %p140
        %p431 = pneg %p137
        %p432 = pneg %p161
        %p433 = pneg %p158
        %p434 = pneg %p182
        %p435 = pneg %p179
        %p436 = pneg %p203
        %p437 = pneg %p200
        %p438 = pneg %p224
        %p439 = pneg %p221
        %p440 = pneg %p245
        %p441 = pneg %p242
        %p442 = pneg %p266
        %p443 = pneg %p263
        %p444 = pneg %p294
        %p445 = pneg %p291
        %s446 = sand.u32 %s281, 1
        %s447 = scalar_lea.sflag [#allocation6], %s446
        %s448 = sand.u32 %s281, 1
        %s449 = smul.addr %s448, 8
        %s450 = scalar_lea.vmem [#allocation10], %s449
        %p451 = scmp.lt.s32.totalorder %s39, 1
        %s452 = scalar_select %p451, %s39, 1
        %p453 = scmp.lt.s32.totalorder %s40, 0
        %s454 = scalar_select %p453, %s40, 0
        %s455 = smul.addr %s452, 4
        %s456 = sadd.s32 %s454, %s455
        %s457 = smul.addr %s456, 4
        %s458 = scalar_lea.vmem %s2, %s457
        %s460 = sld [smem:[#allocation3 + %s39]]
        %v461 = vld [vmem:[%s398] sm:$0xf]
        %v462 = vunpack.c.l.bf16 %v461
        %v463 = vld [vmem:[%s458] sm:$0xf]
        %v464 = vunpack.c.l.bf16 %v463
        %v465 = vmul.f32 %v462, %v464
        %vm466 = vcmask 261120
        %v467 = vsel %vm466, %v465, 0.0
        %468 = vadd.xlane.f32.xlu0 %v467
        %v469 = vpop.xlane.xlu0 %468
        %p470 = scmp.gt.s32.totalorder %s460, 0
        %s471 = scalar_select %p470, 1, 0
        %v472 = vstv %s471
        %vm473 = vcmp.eq.s32.totalorder %v472, 1
        %v474 = vsel %vm473, %v469, -1e+30
        %v475 = vmax.f32 %v474, -1e+30
        %s476 = scalar_lea.vmem %s458, 4
        %v477 = vld [vmem:[%s476] sm:$0xf]
        %v478 = vunpack.c.l.bf16 %v477
        %v479 = vmul.f32 %v462, %v478
        %v480 = vsel %vm466, %v479, 0.0
        %481 = vadd.xlane.f32.xlu0 %v480
        %v482 = vpop.xlane.xlu0 %481
        %p483 = scmp.gt.s32.totalorder %s460, 1
        %s484 = scalar_select %p483, 1, 0
        %v485 = vstv %s484
        %vm486 = vcmp.eq.s32.totalorder %v485, 1
        %v487 = vsel %vm486, %v482, -1e+30
        %v488 = vmax.f32 %v475, %v487
        %s489 = scalar_lea.vmem %s458, 8
        %v490 = vld [vmem:[%s489] sm:$0xf]
        %v491 = vunpack.c.l.bf16 %v490
        %v492 = vmul.f32 %v462, %v491
        %v493 = vsel %vm466, %v492, 0.0
        %494 = vadd.xlane.f32.xlu0 %v493
        %v495 = vpop.xlane.xlu0 %494
        %p496 = scmp.gt.s32.totalorder %s460, 2
        %s497 = scalar_select %p496, 1, 0
        %v498 = vstv %s497
        %vm499 = vcmp.eq.s32.totalorder %v498, 1
        %v500 = vsel %vm499, %v495, -1e+30
        %v501 = vmax.f32 %v488, %v500
        %s502 = scalar_lea.vmem %s458, 12
        %v503 = vld [vmem:[%s502] sm:$0xf]
        %v504 = vunpack.c.l.bf16 %v503
        %v505 = vmul.f32 %v462, %v504
        %v506 = vsel %vm466, %v505, 0.0
        %507 = vadd.xlane.f32.xlu0 %v506
        %v508 = vpop.xlane.xlu0 %507
        %p509 = scmp.gt.s32.totalorder %s460, 3
        %s510 = scalar_select %p509, 1, 0
        %v511 = vstv %s510
        %vm512 = vcmp.eq.s32.totalorder %v511, 1
        %v513 = vsel %vm512, %v508, -1e+30
        %v514 = vmax.f32 %v501, %v513
        %v515 = vsub.f32 %v474, %v514
        %v516 = vmul.f32 %v515, 1.442695
        %v517 = vpow.pop %v516
        %v518 = vadd.f32 %v517, 0.0
        %v519 = vmul.f32 %v517, %v464
        %v520 = vadd.f32 %v519, 0.0
        %v521 = vsub.f32 %v487, %v514
        %v522 = vmul.f32 %v521, 1.442695
        %v523 = vpow.pop %v522
        %v524 = vadd.f32 %v518, %v523
        %v525 = vmul.f32 %v523, %v478
        %v526 = vadd.f32 %v520, %v525
        %v527 = vsub.f32 %v500, %v514
        %v528 = vmul.f32 %v527, 1.442695
        %v529 = vpow.pop %v528
        %v530 = vadd.f32 %v524, %v529
        %v531 = vmul.f32 %v529, %v491
        %v532 = vadd.f32 %v526, %v531
        %v533 = vsub.f32 %v513, %v514
        %v534 = vmul.f32 %v533, 1.442695
        %v535 = vpow.pop %v534
        %v536 = vadd.f32 %v530, %v535
        %v537 = vmul.f32 %v535, %v504
        %v538 = vadd.f32 %v532, %v537
        %v539 = vrcp.pop %v536
        %v540 = vmul.f32 %v538, %v539
        %v541 = vpack.c.bf16 %v540, %v540
        %v542 = vld [vmem:[%s3] sm:$0xf]
        %v543 = vld [vmem:[%s3 + $0x4] sm:$0xf]
        %v544 = vld [vmem:[%s3 + $0x8] sm:$0xf]
        %v545 = vld [vmem:[%s3 + $0xc] sm:$0xf]
        %v546 = vld [vmem:[#allocation7] sm:$0xf]
        %v547 = vld [vmem:[#allocation7 + $0x4] sm:$0xf]
        %v548 = vld [vmem:[#allocation7 + $0x8] sm:$0xf]
        %v549 = vld [vmem:[#allocation7 + $0xc] sm:$0xf]
        %v554 = vunpack.c.l.b16 %v546
        %v555 = vunpack.c.l.b16 %v547
        %v556 = vunpack.c.l.b16 %v548
        %v557 = vunpack.c.l.b16 %v549
        %v558 = vpack.c.b16 %v555, %v554
        %v559 = vpack.c.b16 %v557, %v556
        %v563 = vsel %vm466, %v461, 0
        %565 = vmatprep.subr.bf16.mxu0 0
        %566 = vmatpush1.bf16.msra.mxu0 %v558
        %567 = vmatprep.subr.bf16.mxu0 0
        %568 = vmatpush1.bf16.msra.mxu0 %v559
        %569 = vmatprep.subr.bf16.mxu0 0
        %570 = vmatpush1.bf16.msra.mxu0 0
        %571 = vmatprep.subr.bf16.mxu0 0
        %572 = vmatpush1.bf16.msra.mxu0 0
        %573 = vmatprep.subr.bf16.mxu0 0
        %574 = vmatpush1.bf16.msra.mxu0 0
        %575 = vmatprep.subr.bf16.mxu0 0
        %576 = vmatpush1.bf16.msra.mxu0 0
        %577 = vmatprep.subr.bf16.mxu0 0
        %578 = vmatpush1.bf16.msra.mxu0 0
        %579 = vmatprep.subr.bf16.mxu0 0
        %580 = vmatpush1.bf16.msra.mxu0 0
        %581 = vmatprep.subr.bf16.mxu0 0
        %582 = vmatpush1.bf16.msra.mxu0 0
        %583 = vmatprep.subr.bf16.mxu0 0
        %584 = vmatpush1.bf16.msra.mxu0 0
        %585 = vmatprep.subr.bf16.mxu0 0
        %586 = vmatpush1.bf16.msra.mxu0 0
        %587 = vmatprep.subr.bf16.mxu0 0
        %588 = vmatpush1.bf16.msra.mxu0 0
        %589 = vmatprep.subr.bf16.mxu0 0
        %590 = vmatpush1.bf16.msra.mxu0 0
        %591 = vmatprep.subr.bf16.mxu0 0
        %592 = vmatpush1.bf16.msra.mxu0 0
        %593 = vmatprep.subr.bf16.mxu0 0
        %594 = vmatpush1.bf16.msra.mxu0 0
        %595 = vmatprep.subr.bf16.mxu0 0
        %596 = vmatpush1.bf16.msra.mxu0 0
        %597 = vmatprep.mubr.bf16.mxu0 0
        %598 = vmatmul.mubr.bf16.gmra.mrb[0].mxu0 %v563
        %v599 = vpop.f32.mrb[0].mxu0
        %v600 = vadd.f32 0.0, %v599
        %v601 = vpop.f32.mrb[0].mxu0
        %v602 = vpop.f32.mrb[0].mxu0
        %v603 = vpop.f32.mrb[0].mxu0
        %604 = vdwg.mxu0
        %v609 = vunpack.c.l.b16 %v542
        %v610 = vunpack.c.l.b16 %v543
        %v611 = vunpack.c.l.b16 %v544
        %v612 = vunpack.c.l.b16 %v545
        %v613 = vpack.c.b16 %v610, %v609
        %v614 = vpack.c.b16 %v612, %v611
        %v618 = vsel %vm466, %v541, 0
        %620 = vmatprep.subr.bf16.mxu0 0
        %621 = vmatpush1.bf16.msra.mxu0 %v613
        %622 = vmatprep.subr.bf16.mxu0 0
        %623 = vmatpush1.bf16.msra.mxu0 %v614
        %624 = vmatprep.subr.bf16.mxu0 0
        %625 = vmatpush1.bf16.msra.mxu0 0
        %626 = vmatprep.subr.bf16.mxu0 0
        %627 = vmatpush1.bf16.msra.mxu0 0
        %628 = vmatprep.subr.bf16.mxu0 0
        %629 = vmatpush1.bf16.msra.mxu0 0
        %630 = vmatprep.subr.bf16.mxu0 0
        %631 = vmatpush1.bf16.msra.mxu0 0
        %632 = vmatprep.subr.bf16.mxu0 0
        %633 = vmatpush1.bf16.msra.mxu0 0
        %634 = vmatprep.subr.bf16.mxu0 0
        %635 = vmatpush1.bf16.msra.mxu0 0
        %636 = vmatprep.subr.bf16.mxu0 0
        %637 = vmatpush1.bf16.msra.mxu0 0
        %638 = vmatprep.subr.bf16.mxu0 0
        %639 = vmatpush1.bf16.msra.mxu0 0
        %640 = vmatprep.subr.bf16.mxu0 0
        %641 = vmatpush1.bf16.msra.mxu0 0
        %642 = vmatprep.subr.bf16.mxu0 0
        %643 = vmatpush1.bf16.msra.mxu0 0
        %644 = vmatprep.subr.bf16.mxu0 0
        %645 = vmatpush1.bf16.msra.mxu0 0
        %646 = vmatprep.subr.bf16.mxu0 0
        %647 = vmatpush1.bf16.msra.mxu0 0
        %648 = vmatprep.subr.bf16.mxu0 0
        %649 = vmatpush1.bf16.msra.mxu0 0
        %650 = vmatprep.subr.bf16.mxu0 0
        %651 = vmatpush1.bf16.msra.mxu0 0
        %652 = vmatprep.mubr.bf16.mxu0 0
        %653 = vmatmul.mubr.bf16.gmra.mrb[0].mxu0 %v618
        %v654 = vpop.f32.mrb[0].mxu0
        %v655 = vadd.f32 %v600, %v654
        %v656 = vpop.f32.mrb[0].mxu0
        %v657 = vpop.f32.mrb[0].mxu0
        %v658 = vpop.f32.mrb[0].mxu0
        %659 = vdwg.mxu0
        %v660 = vtanh.pop %v655
        %v661 = vadd.f32 %v660, %v462
        %v662 = vsel %vm466, %v661, 0.0
        %663 = vadd.xlane.f32.xlu0 %v662
        %v664 = vpop.xlane.xlu0 %663
        %v665 = vrcp.pop 32.0
        %v666 = vmul.f32 %v664, %v665
        %v667 = vsub.f32 %v661, %v666
        %v668 = vmul.f32 %v667, %v667
        %v669 = vsel %vm466, %v668, 0.0
        %670 = vadd.xlane.f32.xlu0 %v669
        %v671 = vpop.xlane.xlu0 %670
        %v672 = vrcp.pop 31.0
        %v673 = vmul.f32 %v671, %v672
        %v674 = vrsqrt.pop %v673
        %v675 = vmul.f32 %v673, %v674
        %vm676 = vcmp.eq.f32.partialorder %v673, inf
        %v677 = vsel %vm676, %v673, %v675
        %vm678 = vcmp.eq.f32.partialorder %v673, 0.0
        %v679 = vand.u32 %v673, 2147483648
        %v680 = vsel %vm678, %v679, %v677
        %v681 = vld [vmem:[%s9] sm:$0x1]
        %v683 = vlaneseq
        %v684 = vshrl.u32 %v683, 7
        %v685 = vsub.s32 0, %v684
        %v686 = vrot.slane %v681, %v685
        %v688 = vmul.f32 %v686, %v667
        %v689 = vadd.f32 %v680, 1e-06
        %v690 = vrcp.pop %v689
        %v691 = vmul.f32 %v688, %v690
        %v692 = vld [vmem:[%s10] sm:$0x1]
        %v694 = vlaneseq
        %v695 = vshrl.u32 %v694, 7
        %v696 = vsub.s32 0, %v695
        %v697 = vrot.slane %v692, %v696
        %v699 = vadd.f32 %v691, %v697
        %v700 = vpack.c.bf16 %v699, %v699
        %v701 = vld [vmem:[#allocation9] sm:$0xf]
        %v702 = vld [vmem:[#allocation9 + $0x4] sm:$0xf]
        %v703 = vld [vmem:[#allocation9 + $0x8] sm:$0xf]
        %v704 = vld [vmem:[#allocation9 + $0xc] sm:$0xf]
        %v705 = vld [vmem:[%s6] sm:$0x1]
        %v707 = vlaneseq
        %v708 = vshrl.u32 %v707, 7
        %v709 = vsub.s32 0, %v708
        %v710 = vrot.slane %v705, %v709
        %v716 = vunpack.c.l.b16 %v701
        %v717 = vunpack.c.l.b16 %v702
        %v718 = vunpack.c.l.b16 %v703
        %v719 = vunpack.c.l.b16 %v704
        %v720 = vpack.c.b16 %v717, %v716
        %v721 = vpack.c.b16 %v719, %v718
        %v725 = vsel %vm466, %v700, 0
        %727 = vmatprep.subr.bf16.mxu0 0
        %728 = vmatpush1.bf16.msra.mxu0 %v720
        %729 = vmatprep.subr.bf16.mxu0 0
        %730 = vmatpush1.bf16.msra.mxu0 %v721
        %731 = vmatprep.subr.bf16.mxu0 0
        %732 = vmatpush1.bf16.msra.mxu0 0
        %733 = vmatprep.subr.bf16.mxu0 0
        %734 = vmatpush1.bf16.msra.mxu0 0
        %735 = vmatprep.subr.bf16.mxu0 0
        %736 = vmatpush1.bf16.msra.mxu0 0
        %737 = vmatprep.subr.bf16.mxu0 0
        %738 = vmatpush1.bf16.msra.mxu0 0
        %739 = vmatprep.subr.bf16.mxu0 0
        %740 = vmatpush1.bf16.msra.mxu0 0
        %741 = vmatprep.subr.bf16.mxu0 0
        %742 = vmatpush1.bf16.msra.mxu0 0
        %743 = vmatprep.subr.bf16.mxu0 0
        %744 = vmatpush1.bf16.msra.mxu0 0
        %745 = vmatprep.subr.bf16.mxu0 0
        %746 = vmatpush1.bf16.msra.mxu0 0
        %747 = vmatprep.subr.bf16.mxu0 0
        %748 = vmatpush1.bf16.msra.mxu0 0
        %749 = vmatprep.subr.bf16.mxu0 0
        %750 = vmatpush1.bf16.msra.mxu0 0
        %751 = vmatprep.subr.bf16.mxu0 0
        %752 = vmatpush1.bf16.msra.mxu0 0
        %753 = vmatprep.subr.bf16.mxu0 0
        %754 = vmatpush1.bf16.msra.mxu0 0
        %755 = vmatprep.subr.bf16.mxu0 0
        %756 = vmatpush1.bf16.msra.mxu0 0
        %757 = vmatprep.subr.bf16.mxu0 0
        %758 = vmatpush1.bf16.msra.mxu0 0
        %759 = vmatprep.mubr.bf16.mxu0 0
        %760 = vmatmul.mubr.bf16.gmra.mrb[0].mxu0 %v725
        %v761 = vpop.f32.mrb[0].mxu0
        %v762 = vadd.f32 %v710, %v761
        %v763 = vpop.f32.mrb[0].mxu0
        %v764 = vpop.f32.mrb[0].mxu0
        %v765 = vpop.f32.mrb[0].mxu0
        %766 = vdwg.mxu0
        %v767 = vmax.f32 %v762, 0.0
        %v768 = vpack.c.bf16 %v767, %v767
        %v769 = vld [vmem:[%s7] sm:$0xf]
        %v770 = vld [vmem:[%s7 + $0x4] sm:$0xf]
        %v771 = vld [vmem:[%s7 + $0x8] sm:$0xf]
        %v772 = vld [vmem:[%s7 + $0xc] sm:$0xf]
        %v773 = vld [vmem:[%s7 + $0x10] sm:$0xf]
        %v774 = vld [vmem:[%s7 + $0x14] sm:$0xf]
        %v775 = vld [vmem:[%s7 + $0x18] sm:$0xf]
        %v776 = vld [vmem:[%s7 + $0x1c] sm:$0xf]
        %v777 = vld [vmem:[%s8] sm:$0x1]
        %v779 = vlaneseq
        %v780 = vshrl.u32 %v779, 7
        %v781 = vsub.s32 0, %v780
        %v782 = vrot.slane %v777, %v781
        %v792 = vunpack.c.l.b16 %v769
        %v793 = vunpack.c.l.b16 %v770
        %v794 = vunpack.c.l.b16 %v771
        %v795 = vunpack.c.l.b16 %v772
        %v796 = vunpack.c.l.b16 %v773
        %v797 = vunpack.c.l.b16 %v774
        %v798 = vunpack.c.l.b16 %v775
        %v799 = vunpack.c.l.b16 %v776
        %v800 = vpack.c.b16 %v793, %v792
        %v801 = vpack.c.b16 %v795, %v794
        %v802 = vpack.c.b16 %v797, %v796
        %v803 = vpack.c.b16 %v799, %v798
        %vm808 = vcmask 523264
        %v810 = vsel %vm808, %v768, 0
        %812 = vmatprep.subr.bf16.mxu0 0
        %813 = vmatpush1.bf16.msra.mxu0 %v800
        %814 = vmatprep.subr.bf16.mxu0 0
        %815 = vmatpush1.bf16.msra.mxu0 %v801
        %816 = vmatprep.subr.bf16.mxu0 0
        %817 = vmatpush1.bf16.msra.mxu0 %v802
        %818 = vmatprep.subr.bf16.mxu0 0
        %819 = vmatpush1.bf16.msra.mxu0 %v803
        %820 = vmatprep.subr.bf16.mxu0 0
        %821 = vmatpush1.bf16.msra.mxu0 0
        %822 = vmatprep.subr.bf16.mxu0 0
        %823 = vmatpush1.bf16.msra.mxu0 0
        %824 = vmatprep.subr.bf16.mxu0 0
        %825 = vmatpush1.bf16.msra.mxu0 0
        %826 = vmatprep.subr.bf16.mxu0 0
        %827 = vmatpush1.bf16.msra.mxu0 0
        %828 = vmatprep.subr.bf16.mxu0 0
        %829 = vmatpush1.bf16.msra.mxu0 0
        %830 = vmatprep.subr.bf16.mxu0 0
        %831 = vmatpush1.bf16.msra.mxu0 0
        %832 = vmatprep.subr.bf16.mxu0 0
        %833 = vmatpush1.bf16.msra.mxu0 0
        %834 = vmatprep.subr.bf16.mxu0 0
        %835 = vmatpush1.bf16.msra.mxu0 0
        %836 = vmatprep.subr.bf16.mxu0 0
        %837 = vmatpush1.bf16.msra.mxu0 0
        %838 = vmatprep.subr.bf16.mxu0 0
        %839 = vmatpush1.bf16.msra.mxu0 0
        %840 = vmatprep.subr.bf16.mxu0 0
        %841 = vmatpush1.bf16.msra.mxu0 0
        %842 = vmatprep.subr.bf16.mxu0 0
        %843 = vmatpush1.bf16.msra.mxu0 0
        %844 = vmatprep.mubr.bf16.mxu0 0
        %845 = vmatmul.mubr.bf16.gmra.mrb[0].mxu0 %v810
        %v846 = vpop.f32.mrb[0].mxu0
        %v847 = vadd.f32 %v782, %v846
        %v848 = vpop.f32.mrb[0].mxu0
        %v849 = vpop.f32.mrb[0].mxu0
        %v850 = vpop.f32.mrb[0].mxu0
        %851 = vdwg.mxu0
        %v852 = vadd.f32 %v847, %v661
        %853 = vst.msk [vmem:[%s450] sm:$0xff] %vm466, %v852
        %s854 = sand.u32 %s281, 1
        %s855 = scalar_lea.sflag [#allocation6], %s854
        %s856 = sand.u32 %s281, 1
        %s857 = smul.addr %s856, 8
        %s858 = scalar_lea.vmem [#allocation10], %s857
        // Predicated region
        $region73: #{tpu_custom_call.1} parent=59 // pred_check
          %p859 = pneg %p291
        $region74: #{tpu_custom_call.1} parent=59 // pred_check_branch
          %861 = sbr.rel (%p859) target = $region76
        $region75: #{tpu_custom_call.1} parent=59 // pred_region
          %s863 = ssub.s32 128, 128
          %864 = vsyncadd %s855, %s863
          %s865 = sadd.s32 %s40, %s39
          %s866 = smul.addr %s865, 128
          %s867 = scalar_lea.hbm %s11, %s866
          %s869 = sshll.u32 %s858, 4
          %s870 = int_to_ptr.vmem [resolvable:$true] %s869
          %872 = dma.vmem_to_hbm [thread:$0]  %s870, 128, %s867, %s855
        $region76: #{tpu_custom_call.1} parent=59 // pred_fallthru
          _
      $region60: #{tpu_custom_call.1} parent=5 // pred_fallthru
        _
      %p873 = scmp.le.s32.totalorder 2, %s30
      // Predicated region
      $region77: #{tpu_custom_call.1} parent=5 // pred_check
        %p874 = pneg %p873
      $region78: #{tpu_custom_call.1} parent=5 // pred_check_branch
        %876 = sbr.rel (%p874) target = $region80
      $region79: #{tpu_custom_call.1} parent=5 // pred_region
        %s877 = ssub.s32 %s30, 2
        // Predicated region
        $region81: #{tpu_custom_call.1} parent=79 // pred_check
          %p878 = pneg %p297
        $region82: #{tpu_custom_call.1} parent=79 // pred_check_branch
          %880 = sbr.rel (%p878) target = $region84
        $region83: #{tpu_custom_call.1} parent=79 // pred_region
          %s881 = sand.u32 %s282, 1
          %s882 = scalar_lea.sflag [#allocation6], %s881
          %s883 = sand.u32 %s282, 1
          %s884 = smul.addr %s883, 8
          %s885 = scalar_lea.vmem [#allocation10], %s884
          %886 = dma.done %s882, 128
        $region84: #{tpu_custom_call.1} parent=79 // pred_fallthru
          _
      $region80: #{tpu_custom_call.1} parent=5 // pred_fallthru
        _
    $region6: #{tpu_custom_call.1} parent=1 // loop_footer
      %s34 = sadd.s32 1, %s30
    $region7: #{tpu_custom_call.1} parent=1 // loop_footer_branch
      %29 = sbr.rel target = $region3
    $region8: #{tpu_custom_call.1} parent=1 // loop_exit
      _
    %887 = vsyncpa [#allocation5], 1
    %s888 = scalar_lea.sflag [#allocation5], 1
    %889 = vsyncpa %s888, 1
    %890 = vsyncpa [#allocation8], 1
    %891 = vsyncpa [#allocation6], 1
    %s892 = scalar_lea.sflag [#allocation6], 1
    %893 = vsyncpa %s892, 1

</llo_original>
